<compile_context>
chip_gen: v5e
topology: v5e:2x2
jax: 0.10.0
libtpu: 0.0.40
codegen_flags: <defaults>
</compile_context>

<pallas_src>
import functools

import jax
import jax.numpy as jnp
from jax import lax
from jax.experimental import pallas as pl
from jax.experimental.pallas import tpu as pltpu


def _round_up(x, m):
    return (x + m - 1) // m * m


def _pad_to(x, shape):
    pads = [(0, t - s) for s, t in zip(x.shape, shape)]
    if any(hi for _, hi in pads):
        x = jnp.pad(x, pads)
    return x


def _vmem_step_bytes(tq, sp, dp, ap, in_b, w_b, out_b, align_b):
    """Rough per-grid-step VMEM footprint (pipelined blocks double-buffered)."""
    blocks = 2 * (tq * dp * in_b          # source tile
                  + sp * dp * in_b        # memory bank (grid-invariant)
                  + 2 * dp * ap * w_b     # wc^T and ws^T (grid-invariant)
                  + tq * ap * out_b       # attn_h tile
                  + tq * sp * align_b)    # align tile
    temps = (3 * tq * sp + tq * dp + 2 * tq * ap) * 4   # f32 in-kernel temporaries
    return blocks + temps


def _pick_tq(t8, sp, dp, ap, in_b, w_b, out_b, align_b, budget):
    """Largest T tile (multiple of 8) keeping the per-step footprint under budget."""
    if t8 <= 256 and _vmem_step_bytes(t8, sp, dp, ap, in_b, w_b, out_b, align_b) <= budget:
        return t8
    for cand in (256, 128, 64, 32, 16, 8):
        if cand <= t8 and _vmem_step_bytes(cand, sp, dp, ap, in_b, w_b, out_b, align_b) <= budget:
            return cand
    return 8


def _global_attn_dot_kernel(lens_ref,    # scalar prefetch: (B,) int32 in SMEM
                            src_ref,     # (1, TQ, Dp)
                            mem_ref,     # (1, Sp, Dp)
                            wct_ref,     # (Dp, Ap)  pre-transposed, acts on context c
                            wst_ref,     # (Dp, Ap)  pre-transposed, acts on source q
                            out_ref,     # (1, TQ, Ap)
                            attn_ref):   # (1, TQ, Sp)
    b = pl.program_id(0)

    src = src_ref[0]                      # (TQ, Dp), kept in input dtype for the MXU
    mem = mem_ref[0]                      # (Sp, Dp)

    # score(h_t, h_s) = h_t @ h_s^T — contraction expressed directly (no XLU transpose).
    scores = lax.dot_general(
        src, mem, dimension_numbers=(((1,), (1,)), ((), ())),
        preferred_element_type=jnp.float32)                      # (TQ, Sp) f32

    # sequence_mask: positions >= memory_lengths[b] get a large finite negative
    # (so a zero-length row degrades to a uniform distribution instead of NaN).
    length = lens_ref[b]
    col = lax.broadcasted_iota(jnp.int32, scores.shape, 1)
    scores = jnp.where(col < length, scores, jnp.finfo(jnp.float32).min)

    # softmax over src_len — statistics kept in f32.
    m = jnp.max(scores, axis=-1, keepdims=True)
    e = jnp.exp(scores - m)
    denom = jnp.sum(e, axis=-1, keepdims=True)
    attn = e * pl.reciprocal(denom, approx=True)                 # EUP slot, ~free

    # context c = attn @ memory_bank (operands fed to the MXU in their own dtype).
    c = jnp.dot(attn.astype(mem.dtype), mem,
                preferred_element_type=jnp.float32)              # (TQ, Dp) f32

    # linear_out([c, source]) split into two matmuls with pre-transposed weights.
    h = (jnp.dot(c.astype(wct_ref.dtype), wct_ref[...],
                 preferred_element_type=jnp.float32)
         + jnp.dot(src, wst_ref[...],
                   preferred_element_type=jnp.float32))          # (TQ, Ap) f32

    out_ref[0] = jnp.tanh(h).astype(out_ref.dtype)
    attn_ref[0] = attn.astype(attn_ref.dtype)


@functools.partial(jax.jit, static_argnames=("align_dtype",))
def global_attention_dot(source, memory_bank, memory_lengths, w_out,
                         *, align_dtype=jnp.float32):
    """Pallas implementation of GlobalAttention(attn_type='dot').forward.

    source:         (B, T, D)
    memory_bank:    (B, S, D)
    memory_lengths: (B,) int
    w_out:          (A, S_dim + T_dim)  = nn.Linear(sdim+tdim, adim, bias=False).weight
    align_dtype:    dtype of the returned attention distribution (bf16 halves
                    the (B, T, S) HBM writeback; f32 matches PyTorch exactly).

    Returns (attn_h (B, T, A), align_vectors (B, T, S)).
    """
    B, T, D = source.shape
    _, S, Ds = memory_bank.shape
    A = w_out.shape[0]
    sdim, tdim = Ds, D

    # Split linear_out weight and pre-transpose ONCE outside the kernel:
    #   W_out = [W_c | W_s]; kernel computes c @ W_c^T + src @ W_s^T.
    wc_t = jnp.transpose(w_out[:, :sdim])     # (sdim, A)
    ws_t = jnp.transpose(w_out[:, sdim:])     # (tdim, A)

    # Lane-dense padding: multiples of 128 on D / S / A, multiple of 8 (or TQ) on T.
    dp = _round_up(max(D, Ds), 128)
    sp = _round_up(S, 128)
    ap = _round_up(A, 128)
    t8 = _round_up(T, 8)

    in_b = jnp.dtype(source.dtype).itemsize
    w_b = jnp.dtype(w_out.dtype).itemsize
    out_b = in_b
    align_b = jnp.dtype(align_dtype).itemsize

    # ~20 MiB per-step budget works on v5e/v6e (128 MiB VMEM) and v7x (64 MiB).
    tq = _pick_tq(t8, sp, dp, ap, in_b, w_b, out_b, align_b, budget=20 << 20)
    tp = _round_up(T, tq)

    src_p = _pad_to(source, (B, tp, dp))
    mem_p = _pad_to(memory_bank, (B, sp, dp))
    wct_p = _pad_to(wc_t, (dp, ap))
    wst_p = _pad_to(ws_t, (dp, ap))

    grid_spec = pltpu.PrefetchScalarGridSpec(
        num_scalar_prefetch=1,
        grid=(B, tp // tq),
        in_specs=[
            pl.BlockSpec((1, tq, dp), lambda b, t, lens: (b, t, 0)),   # source tile
            pl.BlockSpec((1, sp, dp), lambda b, t, lens: (b, 0, 0)),   # memory bank
            pl.BlockSpec((dp, ap), lambda b, t, lens: (0, 0)),         # wc^T
            pl.BlockSpec((dp, ap), lambda b, t, lens: (0, 0)),         # ws^T
        ],
        out_specs=[
            pl.BlockSpec((1, tq, ap), lambda b, t, lens: (b, t, 0)),   # attn_h tile
            pl.BlockSpec((1, tq, sp), lambda b, t, lens: (b, t, 0)),   # align tile
        ],
    )

    vmem_est = _vmem_step_bytes(tq, sp, dp, ap, in_b, w_b, out_b, align_b)
    vmem_limit = int(min(64 << 20, max(16 << 20, vmem_est + (8 << 20))))

    cost = pl.CostEstimate(
        flops=int(2 * B * T * S * D                 # scores
                  + 2 * B * T * S * D               # context
                  + 2 * B * T * (sdim + tdim) * A), # output projection
        transcendentals=int(B * T * S + B * T * A + B * T),
        bytes_accessed=int(source.size * in_b + memory_bank.size * in_b
                           + w_out.size * w_b
                           + B * T * A * out_b + B * T * S * align_b),
    )

    attn_h_p, align_p = pl.pallas_call(
        _global_attn_dot_kernel,
        out_shape=(
            jax.ShapeDtypeStruct((B, tp, ap), source.dtype),
            jax.ShapeDtypeStruct((B, tp, sp), align_dtype),
        ),
        grid_spec=grid_spec,
        compiler_params=pltpu.CompilerParams(
            dimension_semantics=("parallel", "parallel"),
            vmem_limit_bytes=vmem_limit),
        cost_estimate=cost,
    )(memory_lengths.astype(jnp.int32), src_p, mem_p, wct_p, wst_p)

    # Strip the lane-dense padding.
    return attn_h_p[:, :T, :A], align_p[:, :T, :S]


def _reference(source, memory_bank, memory_lengths, w_out):
    """Pure-JAX reference mirroring the PyTorch forward (dot attention)."""
    _, _, _ = source.shape
    S = memory_bank.shape[1]
    align = jnp.einsum("btd,bsd->bts", source, memory_bank)
    mask = (jnp.arange(S)[None, :] < memory_lengths[:, None])[:, None, :]
    align = jnp.where(mask, align, -jnp.inf)
    av = jax.nn.softmax(align, axis=-1)
    c = jnp.einsum("bts,bsd->btd", av, memory_bank)
    concat = jnp.concatenate([c, source], axis=-1)
    attn_h = jnp.tanh(jnp.einsum("btk,ak->bta", concat, w_out))
    return attn_h, av


if __name__ == "__main__":
    # Module config (dot attention): adim = sdim = tdim = dim
    B, T, S, D = 2, 8, 16, 32
    adim = sdim = tdim = D

    key = jax.random.PRNGKey(0)
    k_src, k_mem, k_w = jax.random.split(key, 3)

    source = jax.random.normal(k_src, (B, T, D), dtype=jnp.float32)
    memory_bank = jax.random.normal(k_mem, (B, S, D), dtype=jnp.float32)
    memory_lengths = jnp.array([S, S - 5], dtype=jnp.int32)

    # nn.Linear(sdim+tdim, adim, bias=False) weight, deterministic init.
    bound = 1.0 / jnp.sqrt(jnp.float32(sdim + tdim))
    w_out = jax.random.uniform(k_w, (adim, sdim + tdim),
                               minval=-bound, maxval=bound, dtype=jnp.float32)

    attn_h, align_vectors = global_attention_dot(
        source, memory_bank, memory_lengths, w_out,
        align_dtype=jnp.bfloat16)   # reduced-precision align halves HBM writeback
    jax.block_until_ready((attn_h, align_vectors))

    ref_h, ref_a = _reference(source, memory_bank, memory_lengths, w_out)
    assert attn_h.shape == (B, T, adim) and align_vectors.shape == (B, T, S)
    # Tolerances account for the approx (EUP) reciprocal in the softmax and the
    # bf16 align output (attention weights live in [0, 1]).
    assert jnp.allclose(attn_h, ref_h, atol=1e-2, rtol=1e-2), "attn_h mismatch"
    assert jnp.allclose(align_vectors.astype(jnp.float32), ref_a,
                        atol=1e-2, rtol=1e-2), "align mismatch"

    print("KERNEL_OK")
</pallas_src>

<mosaic_0001>
module attributes {stable_mosaic.version = 11 : i64} {
  func.func @_global_attn_dot_kernel(%arg0: i32, %arg1: i32, %arg2: memref<2xi32, #tpu.memory_space<smem>>, %arg3: memref<1x8x128xf32, #tpu.memory_space<vmem>>, %arg4: memref<1x128x128xf32, #tpu.memory_space<vmem>>, %arg5: memref<128x128xf32, #tpu.memory_space<vmem>>, %arg6: memref<128x128xf32, #tpu.memory_space<vmem>>, %arg7: memref<1x8x128xf32, #tpu.memory_space<vmem>>, %arg8: memref<1x8x128xbf16, #tpu.memory_space<vmem>>) attributes {dimension_semantics = [#tpu.dimension_semantics<parallel>, #tpu.dimension_semantics<parallel>], iteration_bounds = array<i64: 2, 1>, scalar_prefetch = 1 : i64, scratch_operands = 0 : i64, tpu.core_type = #tpu.core_type<tc>, window_params = [{transform_indices = @transform_0, window_bounds = array<i64: 1, 8, 128>}, {transform_indices = @transform_1, window_bounds = array<i64: 1, 128, 128>}, {pipeline_mode = #tpu.pipeline_mode<synchronous>, transform_indices = @transform_2, window_bounds = array<i64: 128, 128>}, {pipeline_mode = #tpu.pipeline_mode<synchronous>, transform_indices = @transform_3, window_bounds = array<i64: 128, 128>}, {transform_indices = @transform_4, window_bounds = array<i64: 1, 8, 128>}, {transform_indices = @transform_5, window_bounds = array<i64: 1, 8, 128>}]} {
    %c0 = arith.constant 0 : index
    %c0_0 = arith.constant 0 : index
    %c0_1 = arith.constant 0 : index
    %0 = vector.load %arg3[%c0, %c0_0, %c0_1] : memref<1x8x128xf32, #tpu.memory_space<vmem>>, vector<1x8x128xf32>
    %1 = vector.shape_cast %0 : vector<1x8x128xf32> to vector<8x128xf32>
    %c0_2 = arith.constant 0 : index
    %c0_3 = arith.constant 0 : index
    %c0_4 = arith.constant 0 : index
    %2 = vector.load %arg4[%c0_2, %c0_3, %c0_4] : memref<1x128x128xf32, #tpu.memory_space<vmem>>, vector<1x128x128xf32>
    %3 = vector.shape_cast %2 : vector<1x128x128xf32> to vector<128x128xf32>
    %cst = arith.constant dense<0.000000e+00> : vector<8x128xf32>
    %4 = tpu.matmul %1, %3, %cst {dimension_numbers = #tpu.dot_dimension_numbers<[1], [1], [0], [0], [0, 0, 1, 0], [], []>} : vector<8x128xf32>, vector<128x128xf32>, vector<8x128xf32> -> vector<8x128xf32>
    %5 = arith.index_cast %arg0 : i32 to index
    %6 = memref.load %arg2[%5] : memref<2xi32, #tpu.memory_space<smem>>
    %7 = tpu.iota {dimensions = array<i32: 1>} : vector<8x128xi32>
    %8 = vector.broadcast %6 : i32 to vector<8x128xi32>
    %9 = arith.cmpi slt, %7, %8 : vector<8x128xi32>
    %cst_5 = arith.constant -3.40282347E+38 : f32
    %10 = vector.broadcast %cst_5 : f32 to vector<8x128xf32>
    %11 = arith.select %9, %4, %10 : vector<8x128xi1>, vector<8x128xf32>
    %cst_6 = arith.constant dense<0xFF800000> : vector<8xf32>
    %12 = vector.multi_reduction <maximumf>, %11, %cst_6 [1] : vector<8x128xf32> to vector<8xf32>
    %13 = vector.shape_cast %12 : vector<8xf32> to vector<8x1xf32>
    %14 = vector.broadcast %13 : vector<8x1xf32> to vector<8x128xf32>
    %15 = arith.subf %11, %14 : vector<8x128xf32>
    %16 = math.exp %15 : vector<8x128xf32>
    %cst_7 = arith.constant dense<0.000000e+00> : vector<8xf32>
    %17 = vector.multi_reduction <add>, %16, %cst_7 [1] : vector<8x128xf32> to vector<8xf32>
    %18 = vector.shape_cast %17 : vector<8xf32> to vector<8x1xf32>
    %19 = tpu.reciprocal %18 {approx = true} : vector<8x1xf32> -> vector<8x1xf32>
    %20 = vector.broadcast %19 : vector<8x1xf32> to vector<8x128xf32>
    %21 = arith.mulf %16, %20 : vector<8x128xf32>
    %cst_8 = arith.constant dense<0.000000e+00> : vector<8x128xf32>
    %22 = tpu.matmul %21, %3, %cst_8 {dimension_numbers = #tpu.dot_dimension_numbers<[1], [0], [0], [1], [0, 0, 1, 1], [], []>} : vector<8x128xf32>, vector<128x128xf32>, vector<8x128xf32> -> vector<8x128xf32>
    %c0_9 = arith.constant 0 : index
    %c0_10 = arith.constant 0 : index
    %23 = vector.load %arg5[%c0_9, %c0_10] : memref<128x128xf32, #tpu.memory_space<vmem>>, vector<128x128xf32>
    %cst_11 = arith.constant dense<0.000000e+00> : vector<8x128xf32>
    %24 = tpu.matmul %22, %23, %cst_11 {dimension_numbers = #tpu.dot_dimension_numbers<[1], [0], [0], [1], [0, 0, 1, 1], [], []>} : vector<8x128xf32>, vector<128x128xf32>, vector<8x128xf32> -> vector<8x128xf32>
    %c0_12 = arith.constant 0 : index
    %c0_13 = arith.constant 0 : index
    %25 = vector.load %arg6[%c0_12, %c0_13] : memref<128x128xf32, #tpu.memory_space<vmem>>, vector<128x128xf32>
    %cst_14 = arith.constant dense<0.000000e+00> : vector<8x128xf32>
    %26 = tpu.matmul %1, %25, %cst_14 {dimension_numbers = #tpu.dot_dimension_numbers<[1], [0], [0], [1], [0, 0, 1, 1], [], []>} : vector<8x128xf32>, vector<128x128xf32>, vector<8x128xf32> -> vector<8x128xf32>
    %27 = arith.addf %24, %26 : vector<8x128xf32>
    %28 = math.tanh %27 : vector<8x128xf32>
    %c0_15 = arith.constant 0 : index
    %c0_16 = arith.constant 0 : index
    %c0_17 = arith.constant 0 : index
    %29 = vector.load %arg7[%c0_15, %c0_16, %c0_17] : memref<1x8x128xf32, #tpu.memory_space<vmem>>, vector<1x8x128xf32>
    %30 = vector.shape_cast %29 : vector<1x8x128xf32> to vector<8x128xf32>
    %31 = vector.shape_cast %28 : vector<8x128xf32> to vector<1x8x128xf32>
    tpu.vector_store %arg7[%c0_15, %c0_16, %c0_17], %31 {strides = array<i32>} : memref<1x8x128xf32, #tpu.memory_space<vmem>>, vector<1x8x128xf32>,
    %32 = arith.truncf %21 : vector<8x128xf32> to vector<8x128xbf16>
    %c0_18 = arith.constant 0 : index
    %c0_19 = arith.constant 0 : index
    %c0_20 = arith.constant 0 : index
    %33 = vector.load %arg8[%c0_18, %c0_19, %c0_20] : memref<1x8x128xbf16, #tpu.memory_space<vmem>>, vector<1x8x128xbf16>
    %34 = vector.shape_cast %33 : vector<1x8x128xbf16> to vector<8x128xbf16>
    %35 = vector.shape_cast %32 : vector<8x128xbf16> to vector<1x8x128xbf16>
    tpu.vector_store %arg8[%c0_18, %c0_19, %c0_20], %35 {strides = array<i32>} : memref<1x8x128xbf16, #tpu.memory_space<vmem>>, vector<1x8x128xbf16>,
    return
  }
  func.func @transform_0(%arg0: i32, %arg1: i32, %arg2: memref<2xi32, #tpu.memory_space<smem>>) -> (i32, i32, i32) {
    %c0_i32 = arith.constant 0 : i32
    %c0_i32_0 = arith.constant 0 : i32
    return %arg0, %arg1, %c0_i32 : i32, i32, i32
  }
  func.func @transform_1(%arg0: i32, %arg1: i32, %arg2: memref<2xi32, #tpu.memory_space<smem>>) -> (i32, i32, i32) {
    %c0_i32 = arith.constant 0 : i32
    %c0_i32_0 = arith.constant 0 : i32
    %c0_i32_1 = arith.constant 0 : i32
    return %arg0, %c0_i32, %c0_i32_0 : i32, i32, i32
  }
  func.func @transform_2(%arg0: i32, %arg1: i32, %arg2: memref<2xi32, #tpu.memory_space<smem>>) -> (i32, i32) {
    %c0_i32 = arith.constant 0 : i32
    %c0_i32_0 = arith.constant 0 : i32
    %c0_i32_1 = arith.constant 0 : i32
    return %c0_i32, %c0_i32_0 : i32, i32
  }
  func.func @transform_3(%arg0: i32, %arg1: i32, %arg2: memref<2xi32, #tpu.memory_space<smem>>) -> (i32, i32) {
    %c0_i32 = arith.constant 0 : i32
    %c0_i32_0 = arith.constant 0 : i32
    %c0_i32_1 = arith.constant 0 : i32
    return %c0_i32, %c0_i32_0 : i32, i32
  }
  func.func @transform_4(%arg0: i32, %arg1: i32, %arg2: memref<2xi32, #tpu.memory_space<smem>>) -> (i32, i32, i32) {
    %c0_i32 = arith.constant 0 : i32
    %c0_i32_0 = arith.constant 0 : i32
    return %arg0, %arg1, %c0_i32 : i32, i32, i32
  }
  func.func @transform_5(%arg0: i32, %arg1: i32, %arg2: memref<2xi32, #tpu.memory_space<smem>>) -> (i32, i32, i32) {
    %c0_i32 = arith.constant 0 : i32
    %c0_i32_0 = arith.constant 0 : i32
    return %arg0, %arg1, %c0_i32 : i32, i32, i32
  }
}

</mosaic_0001>

<llo_original>
// kernel: global_attention_dot.1
$region0: #{global_attention_dot.1}
  #allocation0 [shape = 'u32[]', space=smem, size = 0x4, offset = 0x4, fixed_abs, tag = 'smem constant byte address 0x4 - core index']
  #allocation1 [shape = 'u32[72,128]{1,0:T(1,128)}', space=vmem, size = 0x9000, scoped, tag = 'internal scratch']
  #allocation2 [shape = 's32[1]{0}', space=sflag, size = 0x4, scoped, tag = 'scoped memory for global_attention_dot.1']
  #allocation3 [shape = 'u8[512]{0}', space=smem, size = 0x200, scoped, tag = 'prefetched SMEM operand 0']
  %s0 = inlined_call_operand.vmem [shape: s32[2], index: 0, kind: input, shape index: {}]
  %s1 = inlined_call_operand.vmem [shape: f32[2,8,128], index: 1, kind: input, shape index: {}]
  %s2 = inlined_call_operand.vmem [shape: f32[2,128,128], index: 2, kind: input, shape index: {}]
  %s3 = inlined_call_operand.vmem [shape: f32[128,128], index: 3, kind: input, shape index: {}]
  %s4 = inlined_call_operand.vmem [shape: f32[128,128], index: 4, kind: input, shape index: {}]
  %s5 = inlined_call_operand.hbm [shape: f32[2,8,128], index: 5, kind: output, shape index: {0}]
  %s6 = inlined_call_operand.hbm [shape: bf16[2,8,128], index: 6, kind: output, shape index: {1}]
  %7 = xla_tuple %s5, %s6
  %s8 = sld [smem:[#allocation0]]
  $region57: #{global_attention_dot.1} parent=0
    _
  %s10 = ssub.s32 1, %s8
  %s11 = scalar_select 0, %s10, %s8
  %s13 = sshll.u32 %s0, 4
  %s14 = int_to_ptr.vmem [resolvable:$true] %s13
  %16 = dma.vmem_to_smem %s14, 16, [#allocation3], [#allocation2]
  %18 = dma.done [#allocation2], 16
  %19 = sfence
  $region1: #{global_attention_dot.1} parent=0
    #allocation4 [shape = 'u8[8192]{0}', space=vmem, size = 0x2000, scoped, tag = 'output window, operand 0']
    #allocation5 [shape = 's32[2]{0}', space=sflag, size = 0x8, scoped, tag = 'scoped memory for global_attention_dot.1']
    #allocation6 [shape = 'u8[4096]{0}', space=vmem, size = 0x1000, scoped, tag = 'output window, operand 1']
    #allocation7 [shape = 's32[2]{0}', space=sflag, size = 0x8, scoped, tag = 'scoped memory for global_attention_dot.1']
    %20 = vsyncpa [#allocation5], 0
    %s21 = scalar_lea.sflag [#allocation5], 1
    %22 = vsyncpa %s21, 0
    %23 = vsyncpa [#allocation7], 0
    %s24 = scalar_lea.sflag [#allocation7], 1
    %25 = vsyncpa %s24, 0
    loop: start=0, step=1, limit=4
    $region2: #{global_attention_dot.1} parent=1 // loop_pre_header
      _
    $region3: #{global_attention_dot.1} parent=1 // loop_header
      %s27 = sphi 0, %s31
      %p28 = scmp.ge.s32.totalorder %s27, 4
      %s34 = sphi 0, %s46
      %s35 = sphi 0, %s42
      %s36 = sphi 0, %s34
      %s37 = sphi 0, %s35
      %s38 = sphi 0, %s36
      %s39 = sphi 0, %s37
      %s51 = sphi 0, %s53
      %s54 = sphi 0, %s51
      %s55 = sphi 0, %s54
      %s71 = sphi 0, %s55
      %s77 = sphi 0, %s79
      %s80 = sphi 0, %s77
      %s81 = sphi 0, %s80
      %s97 = sphi 0, %s81
      %s101 = sphi 0, %s101
      %s103 = sphi 0, %s101
      %s104 = sphi 0, %s103
      %s118 = sphi 0, %s104
      %s122 = sphi 0, %s122
      %s124 = sphi 0, %s122
      %s125 = sphi 0, %s124
      %s139 = sphi 0, %s125
      %s147 = sphi 0, %s149
      %s150 = sphi 0, %s147
      %s151 = sphi 0, %s150
      %s167 = sphi 0, %s151
      %s175 = sphi 0, %s177
      %s178 = sphi 0, %s175
      %s179 = sphi 0, %s178
      %s195 = sphi 0, %s179
    $region4: #{global_attention_dot.1} parent=1 // loop_header_branch
      %30 = sbr.rel (%p28) target = $region8
    $region5: #{global_attention_dot.1} parent=1 // loop_body
      %s32 = ssub.s32 %s27, 1
      %s33 = ssub.s32 %s27, 2
      %s40 = sadd.s32 1, %s35
      %p41 = scmp.ge.s32.totalorder %s40, 1
      %s42 = scalar_select %p41, 0, %s40
      %s43 = sadd.s32 1, %s34
      %s44 = scalar_select %p41, %s43, %s34
      %p45 = scmp.ge.s32.totalorder %s44, 2
      %s46 = scalar_select %p45, 0, %s44
      %s47 = ssub.s32 %s34, %s46
      %s48 = ssub.s32 %s35, %s42
      %s49 = sor.u32 %s47, %s48
      %p50 = scmp.eq.s32.totalorder %s49, 0
      %s52 = sadd.s32 %s51, 1
      %s53 = scalar_select %p50, %s51, %s52
      %p56 = pneg %p50
      %p57 = scmp.eq.s32.totalorder %s27, 1
      %p58 = por %p56, %p57
      %p59 = scmp.ne.s32.totalorder %s51, %s54
      %p60 = scmp.eq.s32.totalorder %s27, 0
      %p61 = por %p59, %p60
      %p62 = scmp.ne.s32.totalorder %s51, %s54
      %p63 = scmp.eq.s32.totalorder %s32, 1
      %p64 = por %p62, %p63
      %p65 = scmp.ne.s32.totalorder %s54, %s55
      %p66 = scmp.eq.s32.totalorder %s32, 0
      %p67 = por %p65, %p66
      %p68 = scmp.ne.s32.totalorder %s54, %s55
      %p69 = scmp.eq.s32.totalorder %s33, 1
      %p70 = por %p68, %p69
      %p72 = scmp.ne.s32.totalorder %s55, %s71
      %p73 = scmp.eq.s32.totalorder %s33, 0
      %p74 = por %p72, %p73
      %s75 = ssub.s32 %s34, %s46
      %p76 = scmp.eq.s32.totalorder %s75, 0
      %s78 = sadd.s32 %s77, 1
      %s79 = scalar_select %p76, %s77, %s78
      %p82 = pneg %p76
      %p83 = scmp.eq.s32.totalorder %s27, 1
      %p84 = por %p82, %p83
      %p85 = scmp.ne.s32.totalorder %s77, %s80
      %p86 = scmp.eq.s32.totalorder %s27, 0
      %p87 = por %p85, %p86
      %p88 = scmp.ne.s32.totalorder %s77, %s80
      %p89 = scmp.eq.s32.totalorder %s32, 1
      %p90 = por %p88, %p89
      %p91 = scmp.ne.s32.totalorder %s80, %s81
      %p92 = scmp.eq.s32.totalorder %s32, 0
      %p93 = por %p91, %p92
      %p94 = scmp.ne.s32.totalorder %s80, %s81
      %p95 = scmp.eq.s32.totalorder %s33, 1
      %p96 = por %p94, %p95
      %p98 = scmp.ne.s32.totalorder %s81, %s97
      %p99 = scmp.eq.s32.totalorder %s33, 0
      %p100 = por %p98, %p99
      %s102 = sadd.s32 %s101, 1
      %p105 = scmp.eq.s32.totalorder %s27, 1
      %p106 = scmp.ne.s32.totalorder %s101, %s103
      %p107 = scmp.eq.s32.totalorder %s27, 0
      %p108 = por %p106, %p107
      %p109 = scmp.ne.s32.totalorder %s101, %s103
      %p110 = scmp.eq.s32.totalorder %s32, 1
      %p111 = por %p109, %p110
      %p112 = scmp.ne.s32.totalorder %s103, %s104
      %p113 = scmp.eq.s32.totalorder %s32, 0
      %p114 = por %p112, %p113
      %p115 = scmp.ne.s32.totalorder %s103, %s104
      %p116 = scmp.eq.s32.totalorder %s33, 1
      %p117 = por %p115, %p116
      %p119 = scmp.ne.s32.totalorder %s104, %s118
      %p120 = scmp.eq.s32.totalorder %s33, 0
      %p121 = por %p119, %p120
      %s123 = sadd.s32 %s122, 1
      %p126 = scmp.eq.s32.totalorder %s27, 1
      %p127 = scmp.ne.s32.totalorder %s122, %s124
      %p128 = scmp.eq.s32.totalorder %s27, 0
      %p129 = por %p127, %p128
      %p130 = scmp.ne.s32.totalorder %s122, %s124
      %p131 = scmp.eq.s32.totalorder %s32, 1
      %p132 = por %p130, %p131
      %p133 = scmp.ne.s32.totalorder %s124, %s125
      %p134 = scmp.eq.s32.totalorder %s32, 0
      %p135 = por %p133, %p134
      %p136 = scmp.ne.s32.totalorder %s124, %s125
      %p137 = scmp.eq.s32.totalorder %s33, 1
      %p138 = por %p136, %p137
      %p140 = scmp.ne.s32.totalorder %s125, %s139
      %p141 = scmp.eq.s32.totalorder %s33, 0
      %p142 = por %p140, %p141
      %s143 = ssub.s32 %s34, %s46
      %s144 = ssub.s32 %s35, %s42
      %s145 = sor.u32 %s143, %s144
      %p146 = scmp.eq.s32.totalorder %s145, 0
      %s148 = sadd.s32 %s147, 1
      %s149 = scalar_select %p146, %s147, %s148
      %p152 = pneg %p146
      %p153 = scmp.eq.s32.totalorder %s27, 1
      %p154 = por %p152, %p153
      %p155 = scmp.ne.s32.totalorder %s147, %s150
      %p156 = scmp.eq.s32.totalorder %s27, 0
      %p157 = por %p155, %p156
      %p158 = scmp.ne.s32.totalorder %s147, %s150
      %p159 = scmp.eq.s32.totalorder %s32, 1
      %p160 = por %p158, %p159
      %p161 = scmp.ne.s32.totalorder %s150, %s151
      %p162 = scmp.eq.s32.totalorder %s32, 0
      %p163 = por %p161, %p162
      %p164 = scmp.ne.s32.totalorder %s150, %s151
      %p165 = scmp.eq.s32.totalorder %s33, 1
      %p166 = por %p164, %p165
      %p168 = scmp.ne.s32.totalorder %s151, %s167
      %p169 = scmp.eq.s32.totalorder %s33, 0
      %p170 = por %p168, %p169
      %s171 = ssub.s32 %s34, %s46
      %s172 = ssub.s32 %s35, %s42
      %s173 = sor.u32 %s171, %s172
      %p174 = scmp.eq.s32.totalorder %s173, 0
      %s176 = sadd.s32 %s175, 1
      %s177 = scalar_select %p174, %s175, %s176
      %p180 = pneg %p174
      %p181 = scmp.eq.s32.totalorder %s27, 1
      %p182 = por %p180, %p181
      %p183 = scmp.ne.s32.totalorder %s175, %s178
      %p184 = scmp.eq.s32.totalorder %s27, 0
      %p185 = por %p183, %p184
      %p186 = scmp.ne.s32.totalorder %s175, %s178
      %p187 = scmp.eq.s32.totalorder %s32, 1
      %p188 = por %p186, %p187
      %p189 = scmp.ne.s32.totalorder %s178, %s179
      %p190 = scmp.eq.s32.totalorder %s32, 0
      %p191 = por %p189, %p190
      %p192 = scmp.ne.s32.totalorder %s178, %s179
      %p193 = scmp.eq.s32.totalorder %s33, 1
      %p194 = por %p192, %p193
      %p196 = scmp.ne.s32.totalorder %s179, %s195
      %p197 = scmp.eq.s32.totalorder %s33, 0
      %p198 = por %p196, %p197
      %p199 = scmp.le.s32.totalorder 1, %s27
      %p200 = scmp.lt.s32.totalorder %s27, 3
      %p201 = pnand %p199, %p200
      %p202 = pneg %p201
      // Predicated region
      $region9: #{global_attention_dot.1} parent=5 // pred_check
        _
      $region10: #{global_attention_dot.1} parent=5 // pred_check_branch
        %204 = sbr.rel (%p201) target = $region12
      $region11: #{global_attention_dot.1} parent=5 // pred_region
        %s205 = ssub.s32 %s27, 1
        // Predicated region
        $region13: #{global_attention_dot.1} parent=11 // pred_check
          %p206 = pneg %p114
        $region14: #{global_attention_dot.1} parent=11 // pred_check_branch
          %208 = sbr.rel (%p206) target = $region16
        $region15: #{global_attention_dot.1} parent=11 // pred_region
          _
        $region16: #{global_attention_dot.1} parent=11 // pred_fallthru
          _
        // Predicated region
        $region17: #{global_attention_dot.1} parent=11 // pred_check
          %p209 = pneg %p135
        $region18: #{global_attention_dot.1} parent=11 // pred_check_branch
          %211 = sbr.rel (%p209) target = $region20
        $region19: #{global_attention_dot.1} parent=11 // pred_region
          _
        $region20: #{global_attention_dot.1} parent=11 // pred_fallthru
          _
      $region12: #{global_attention_dot.1} parent=5 // pred_fallthru
        _
      %p212 = scmp.lt.s32.totalorder %s27, 2
      // Predicated region
      $region21: #{global_attention_dot.1} parent=5 // pred_check
        %p213 = pneg %p212
      $region22: #{global_attention_dot.1} parent=5 // pred_check_branch
        %215 = sbr.rel (%p213) target = $region24
      $region23: #{global_attention_dot.1} parent=5 // pred_region
        // Predicated region
        $region25: #{global_attention_dot.1} parent=23 // pred_check
          %p216 = pneg %p61
        $region26: #{global_attention_dot.1} parent=23 // pred_check_branch
          %218 = sbr.rel (%p216) target = $region28
        $region27: #{global_attention_dot.1} parent=23 // pred_region
          %p219 = scmp.lt.s32.totalorder %s34, 1
          %s220 = scalar_select %p219, %s34, 1
          %p221 = scmp.lt.s32.totalorder %s35, 0
          %s222 = scalar_select %p221, %s35, 0
          %s223 = sadd.s32 %s222, %s220
          %s224 = smul.addr %s223, 8
          %s225 = scalar_lea.vmem %s1, %s224
        $region28: #{global_attention_dot.1} parent=23 // pred_fallthru
          _
        // Predicated region
        $region29: #{global_attention_dot.1} parent=23 // pred_check
          %p226 = pneg %p87
        $region30: #{global_attention_dot.1} parent=23 // pred_check_branch
          %228 = sbr.rel (%p226) target = $region32
        $region31: #{global_attention_dot.1} parent=23 // pred_region
          %p229 = scmp.lt.s32.totalorder %s34, 1
          %s230 = scalar_select %p229, %s34, 1
          %s231 = smul.addr %s230, 16
          %s232 = smul.addr %s231, 8
          %s233 = scalar_lea.vmem %s2, %s232
        $region32: #{global_attention_dot.1} parent=23 // pred_fallthru
          _
      $region24: #{global_attention_dot.1} parent=5 // pred_fallthru
        _
      %p234 = scmp.le.s32.totalorder 1, %s27
      %p235 = scmp.lt.s32.totalorder %s27, 3
      %p236 = pnand %p234, %p235
      %p237 = pneg %p236
      // Predicated region
      $region33: #{global_attention_dot.1} parent=5 // pred_check
        _
      $region34: #{global_attention_dot.1} parent=5 // pred_check_branch
        %239 = sbr.rel (%p236) target = $region36
      $region35: #{global_attention_dot.1} parent=5 // pred_region
        %s240 = ssub.s32 %s27, 1
        %p241 = scmp.lt.s32.totalorder %s36, 1
        %s242 = scalar_select %p241, %s36, 1
        %p243 = scmp.lt.s32.totalorder %s37, 0
        %s244 = scalar_select %p243, %s37, 0
        %s245 = sadd.s32 %s244, %s242
        %s246 = smul.addr %s245, 8
        %s247 = scalar_lea.vmem %s1, %s246
        %p248 = pneg %p67
        %p249 = pneg %p64
        %p250 = scmp.lt.s32.totalorder %s36, 1
        %s251 = scalar_select %p250, %s36, 1
        %s252 = smul.addr %s251, 16
        %s253 = smul.addr %s252, 8
        %s254 = scalar_lea.vmem %s2, %s253
        %p255 = pneg %p93
        %p256 = pneg %p90
        %p257 = pneg %p114
        %p258 = pneg %p111
        %p259 = pneg %p135
        %p260 = pneg %p132
        %p261 = pneg %p163
        %p262 = pneg %p160
        %s263 = sand.u32 %s150, 1
        %s264 = scalar_lea.sflag [#allocation5], %s263
        %s265 = sand.u32 %s150, 1
        %s266 = smul.addr %s265, 8
        %s267 = scalar_lea.vmem [#allocation4], %s266
        %p268 = pneg %p191
        %p269 = pneg %p188
        %s270 = sand.u32 %s178, 1
        %s271 = scalar_lea.sflag [#allocation7], %s270
        %s272 = sand.u32 %s178, 1
        %s273 = smul.addr %s272, 4
        %s274 = scalar_lea.vmem [#allocation6], %s273
        %p275 = scmp.lt.s32.totalorder %s36, 1
        %s276 = scalar_select %p275, %s36, 1
        %p277 = scmp.lt.s32.totalorder %s37, 0
        %s278 = scalar_select %p277, %s37, 0
        %s279 = sadd.s32 %s278, %s276
        %s280 = smul.addr %s279, 8
        %s281 = scalar_lea.vmem %s1, %s280
        %p282 = scmp.lt.s32.totalorder %s36, 1
        %s283 = scalar_select %p282, %s36, 1
        %s284 = smul.addr %s283, 16
        %s285 = smul.addr %s284, 8
        %s286 = scalar_lea.vmem %s2, %s285
        %v287 = vld [vmem:[%s281] sm:$0xff]
        %v288 = vld [vmem:[%s286] sm:$0xff]
        %v289 = vld [vmem:[%s286 + $0x8] sm:$0xff]
        %v290 = vld [vmem:[%s286 + $0x10] sm:$0xff]
        %v291 = vld [vmem:[%s286 + $0x18] sm:$0xff]
        %v292 = vld [vmem:[%s286 + $0x20] sm:$0xff]
        %v293 = vld [vmem:[%s286 + $0x28] sm:$0xff]
        %v294 = vld [vmem:[%s286 + $0x30] sm:$0xff]
        %v295 = vld [vmem:[%s286 + $0x38] sm:$0xff]
        %v296 = vld [vmem:[%s286 + $0x40] sm:$0xff]
        %v297 = vld [vmem:[%s286 + $0x48] sm:$0xff]
        %v298 = vld [vmem:[%s286 + $0x50] sm:$0xff]
        %v299 = vld [vmem:[%s286 + $0x58] sm:$0xff]
        %v300 = vld [vmem:[%s286 + $0x60] sm:$0xff]
        %v301 = vld [vmem:[%s286 + $0x68] sm:$0xff]
        %v302 = vld [vmem:[%s286 + $0x70] sm:$0xff]
        %v303 = vld [vmem:[%s286 + $0x78] sm:$0xff]
        %304 = vmatpush.xpose.msra.mxu0 %v303
        %305 = vmatpush.xpose.msra.mxu0 %v302
        %306 = vmatpush.xpose.msra.mxu0 %v301
        %307 = vmatpush.xpose.msra.mxu0 %v300
        %308 = vmatpush.xpose.msra.mxu0 %v299
        %309 = vmatpush.xpose.msra.mxu0 %v298
        %310 = vmatpush.xpose.msra.mxu0 %v297
        %311 = vmatpush.xpose.msra.mxu0 %v296
        %312 = vmatpush.xpose.msra.mxu0 %v295
        %313 = vmatpush.xpose.msra.mxu0 %v294
        %314 = vmatpush.xpose.msra.mxu0 %v293
        %315 = vmatpush.xpose.msra.mxu0 %v292
        %316 = vmatpush.xpose.msra.mxu0 %v291
        %317 = vmatpush.xpose.msra.mxu0 %v290
        %318 = vmatpush.xpose.msra.mxu0 %v289
        %319 = vmatpush.xpose.msra.mxu0 %v288
        %320 = vmatmul.f32.gmra.mxu0 %v287
        %v321 = vpop.f32.mrf.mxu0
        %v322 = vadd.f32 0.0, %v321
        %323 = vdwg.mxu0
        %s324 = sld [smem:[#allocation3 + %s36]]
        %v325 = vlaneseq
        %v326 = vand.u32 %v325, 127
        %v327 = vstv %s324
        %vm328 = vcmp.lt.s32.totalorder %v326, %v327
        %v329 = vsel %vm328, %v322, -3.4028235e+38
        %330 = vmax.xlane.f32.xlu0 %v329
        %v331 = vpop.xlane.xlu0 %330
        %v332 = vsub.f32 %v329, %v331
        %v333 = vmul.f32 %v332, 1.442695
        %v334 = vpow.pop %v333
        %335 = vadd.xlane.f32.xlu0 %v334
        %v336 = vpop.xlane.xlu0 %335
        %v337 = vrcp.pop %v336
        %v338 = vmul.f32 %v334, %v337
        %339 = vmatpush.msra.mxu0 %v303
        %340 = vmatpush.msra.mxu0 %v302
        %341 = vmatpush.msra.mxu0 %v301
        %342 = vmatpush.msra.mxu0 %v300
        %343 = vmatpush.msra.mxu0 %v299
        %344 = vmatpush.msra.mxu0 %v298
        %345 = vmatpush.msra.mxu0 %v297
        %346 = vmatpush.msra.mxu0 %v296
        %347 = vmatpush.msra.mxu0 %v295
        %348 = vmatpush.msra.mxu0 %v294
        %349 = vmatpush.msra.mxu0 %v293
        %350 = vmatpush.msra.mxu0 %v292
        %351 = vmatpush.msra.mxu0 %v291
        %352 = vmatpush.msra.mxu0 %v290
        %353 = vmatpush.msra.mxu0 %v289
        %354 = vmatpush.msra.mxu0 %v288
        %355 = vmatmul.f32.gmra.mxu0 %v338
        %v356 = vpop.f32.mrf.mxu0
        %v357 = vadd.f32 0.0, %v356
        %358 = vdwg.mxu0
        %v359 = vld [vmem:[%s3] sm:$0xff]
        %v360 = vld [vmem:[%s3 + $0x8] sm:$0xff]
        %v361 = vld [vmem:[%s3 + $0x10] sm:$0xff]
        %v362 = vld [vmem:[%s3 + $0x18] sm:$0xff]
        %v363 = vld [vmem:[%s3 + $0x20] sm:$0xff]
        %v364 = vld [vmem:[%s3 + $0x28] sm:$0xff]
        %v365 = vld [vmem:[%s3 + $0x30] sm:$0xff]
        %v366 = vld [vmem:[%s3 + $0x38] sm:$0xff]
        %v367 = vld [vmem:[%s3 + $0x40] sm:$0xff]
        %v368 = vld [vmem:[%s3 + $0x48] sm:$0xff]
        %v369 = vld [vmem:[%s3 + $0x50] sm:$0xff]
        %v370 = vld [vmem:[%s3 + $0x58] sm:$0xff]
        %v371 = vld [vmem:[%s3 + $0x60] sm:$0xff]
        %v372 = vld [vmem:[%s3 + $0x68] sm:$0xff]
        %v373 = vld [vmem:[%s3 + $0x70] sm:$0xff]
        %v374 = vld [vmem:[%s3 + $0x78] sm:$0xff]
        %v375 = vld [vmem:[%s4] sm:$0xff]
        %v376 = vld [vmem:[%s4 + $0x8] sm:$0xff]
        %v377 = vld [vmem:[%s4 + $0x10] sm:$0xff]
        %v378 = vld [vmem:[%s4 + $0x18] sm:$0xff]
        %v379 = vld [vmem:[%s4 + $0x20] sm:$0xff]
        %v380 = vld [vmem:[%s4 + $0x28] sm:$0xff]
        %v381 = vld [vmem:[%s4 + $0x30] sm:$0xff]
        %v382 = vld [vmem:[%s4 + $0x38] sm:$0xff]
        %v383 = vld [vmem:[%s4 + $0x40] sm:$0xff]
        %v384 = vld [vmem:[%s4 + $0x48] sm:$0xff]
        %v385 = vld [vmem:[%s4 + $0x50] sm:$0xff]
        %v386 = vld [vmem:[%s4 + $0x58] sm:$0xff]
        %v387 = vld [vmem:[%s4 + $0x60] sm:$0xff]
        %v388 = vld [vmem:[%s4 + $0x68] sm:$0xff]
        %v389 = vld [vmem:[%s4 + $0x70] sm:$0xff]
        %v390 = vld [vmem:[%s4 + $0x78] sm:$0xff]
        %391 = vmatpush.msra.mxu0 %v390
        %392 = vmatpush.msra.mxu0 %v389
        %393 = vmatpush.msra.mxu0 %v388
        %394 = vmatpush.msra.mxu0 %v387
        %395 = vmatpush.msra.mxu0 %v386
        %396 = vmatpush.msra.mxu0 %v385
        %397 = vmatpush.msra.mxu0 %v384
        %398 = vmatpush.msra.mxu0 %v383
        %399 = vmatpush.msra.mxu0 %v382
        %400 = vmatpush.msra.mxu0 %v381
        %401 = vmatpush.msra.mxu0 %v380
        %402 = vmatpush.msra.mxu0 %v379
        %403 = vmatpush.msra.mxu0 %v378
        %404 = vmatpush.msra.mxu0 %v377
        %405 = vmatpush.msra.mxu0 %v376
        %406 = vmatpush.msra.mxu0 %v375
        %407 = vmatmul.f32.gmra.mxu0 %v287
        %v408 = vpop.f32.mrf.mxu0
        %v409 = vadd.f32 0.0, %v408
        %410 = vdwg.mxu0
        %411 = vmatpush.msra.mxu0 %v374
        %412 = vmatpush.msra.mxu0 %v373
        %413 = vmatpush.msra.mxu0 %v372
        %414 = vmatpush.msra.mxu0 %v371
        %415 = vmatpush.msra.mxu0 %v370
        %416 = vmatpush.msra.mxu0 %v369
        %417 = vmatpush.msra.mxu0 %v368
        %418 = vmatpush.msra.mxu0 %v367
        %419 = vmatpush.msra.mxu0 %v366
        %420 = vmatpush.msra.mxu0 %v365
        %421 = vmatpush.msra.mxu0 %v364
        %422 = vmatpush.msra.mxu0 %v363
        %423 = vmatpush.msra.mxu0 %v362
        %424 = vmatpush.msra.mxu0 %v361
        %425 = vmatpush.msra.mxu0 %v360
        %426 = vmatpush.msra.mxu0 %v359
        %427 = vmatmul.f32.gmra.mxu0 %v357
        %v428 = vpop.f32.mrf.mxu0
        %v429 = vadd.f32 %v409, %v428
        %430 = vdwg.mxu0
        %v431 = vtanh.pop %v429
        %432 = vst [vmem:[%s267] sm:$0xff] %v431
        %v433 = vpack.c.bf16 %v338, %v338
        %434 = vst [vmem:[%s274] sm:$0xf] %v433
        %s435 = sand.u32 %s150, 1
        %s436 = scalar_lea.sflag [#allocation5], %s435
        %s437 = sand.u32 %s150, 1
        %s438 = smul.addr %s437, 8
        %s439 = scalar_lea.vmem [#allocation4], %s438
        %s440 = sand.u32 %s178, 1
        %s441 = scalar_lea.sflag [#allocation7], %s440
        %s442 = sand.u32 %s178, 1
        %s443 = smul.addr %s442, 4
        %s444 = scalar_lea.vmem [#allocation6], %s443
        // Predicated region
        $region37: #{global_attention_dot.1} parent=35 // pred_check
          %p445 = pneg %p160
        $region38: #{global_attention_dot.1} parent=35 // pred_check_branch
          %447 = sbr.rel (%p445) target = $region40
        $region39: #{global_attention_dot.1} parent=35 // pred_region
          %449 = vsyncadd %s436, 0
          %s450 = sadd.s32 %s37, %s36
          %s451 = smul.addr %s450, 8
          %s452 = scalar_lea.hbm %s5, %s451
          %s454 = sshll.u32 %s439, 4
          %s455 = int_to_ptr.vmem [resolvable:$true] %s454
          %s456 = sshll.u32 %s452, 4
          %s457 = int_to_ptr.hbm [resolvable:$true] %s456
          %459 = dma.vmem_to_hbm [thread:$0]  %s455, 128, %s457, %s436
        $region40: #{global_attention_dot.1} parent=35 // pred_fallthru
          _
        // Predicated region
        $region41: #{global_attention_dot.1} parent=35 // pred_check
          %p460 = pneg %p188
        $region42: #{global_attention_dot.1} parent=35 // pred_check_branch
          %462 = sbr.rel (%p460) target = $region44
        $region43: #{global_attention_dot.1} parent=35 // pred_region
          %464 = vsyncadd %s441, 0
          %s465 = sadd.s32 %s37, %s36
          %s466 = smul.addr %s465, 4
          %s467 = scalar_lea.hbm %s6, %s466
          %s469 = sshll.u32 %s444, 4
          %s470 = int_to_ptr.vmem [resolvable:$true] %s469
          %s471 = sshll.u32 %s467, 4
          %s472 = int_to_ptr.hbm [resolvable:$true] %s471
          %474 = dma.vmem_to_hbm [thread:$0]  %s470, 64, %s472, %s441
        $region44: #{global_attention_dot.1} parent=35 // pred_fallthru
          _
      $region36: #{global_attention_dot.1} parent=5 // pred_fallthru
        _
      %p475 = scmp.le.s32.totalorder 2, %s27
      // Predicated region
      $region45: #{global_attention_dot.1} parent=5 // pred_check
        %p476 = pneg %p475
      $region46: #{global_attention_dot.1} parent=5 // pred_check_branch
        %478 = sbr.rel (%p476) target = $region48
      $region47: #{global_attention_dot.1} parent=5 // pred_region
        %s479 = ssub.s32 %s27, 2
        // Predicated region
        $region49: #{global_attention_dot.1} parent=47 // pred_check
          %p480 = pneg %p166
        $region50: #{global_attention_dot.1} parent=47 // pred_check_branch
          %482 = sbr.rel (%p480) target = $region52
        $region51: #{global_attention_dot.1} parent=47 // pred_region
          %s483 = sand.u32 %s151, 1
          %s484 = scalar_lea.sflag [#allocation5], %s483
          %s485 = sand.u32 %s151, 1
          %s486 = smul.addr %s485, 8
          %s487 = scalar_lea.vmem [#allocation4], %s486
          %489 = dma.done %s484, 128
        $region52: #{global_attention_dot.1} parent=47 // pred_fallthru
          _
        // Predicated region
        $region53: #{global_attention_dot.1} parent=47 // pred_check
          %p490 = pneg %p194
        $region54: #{global_attention_dot.1} parent=47 // pred_check_branch
          %492 = sbr.rel (%p490) target = $region56
        $region55: #{global_attention_dot.1} parent=47 // pred_region
          %s493 = sand.u32 %s179, 1
          %s494 = scalar_lea.sflag [#allocation7], %s493
          %s495 = sand.u32 %s179, 1
          %s496 = smul.addr %s495, 4
          %s497 = scalar_lea.vmem [#allocation6], %s496
          %499 = dma.done %s494, 64
        $region56: #{global_attention_dot.1} parent=47 // pred_fallthru
          _
      $region48: #{global_attention_dot.1} parent=5 // pred_fallthru
        _
    $region6: #{global_attention_dot.1} parent=1 // loop_footer
      %s31 = sadd.s32 1, %s27
    $region7: #{global_attention_dot.1} parent=1 // loop_footer_branch
      %26 = sbr.rel target = $region3
    $region8: #{global_attention_dot.1} parent=1 // loop_exit
      _
    %500 = vsyncpa [#allocation5], 1
    %s501 = scalar_lea.sflag [#allocation5], 1
    %502 = vsyncpa %s501, 1
    %503 = vsyncpa [#allocation7], 1
    %s504 = scalar_lea.sflag [#allocation7], 1
    %505 = vsyncpa %s504, 1

</llo_original>
